<compile_context>
chip_gen: v6e
topology: v6e:2x2x1
jax: 0.10.0
libtpu: 0.0.40
codegen_flags: <defaults>
</compile_context>

<pallas_src>
import functools

import jax
import jax.numpy as jnp
from jax.experimental import pallas as pl
from jax.experimental.pallas import tpu as pltpu

_LANE = 128
_SUBLANE = 8


def _round_up(x, m):
    return -(-x // m) * m


def _largest_divisor(extent, pref, granule):
    """Largest multiple of `granule` dividing `extent`, capped at `pref`."""
    best = granule
    for t in range(granule, min(pref, extent) + 1, granule):
        if extent % t == 0:
            best = t
    return best


def _default_vmem_limit(override=None):
    if override is not None:
        return int(override)
    cap = 64 * 1024 * 1024  # conservative (v7x per-TensorCore VMEM)
    try:
        cap = int(pltpu.get_tpu_info().vmem_capacity_bytes)
    except Exception:
        pass
    # ~85% of physical VMEM, capped at 100 MiB on 128 MiB parts (v5e/v6e).
    return max(32 * 1024 * 1024, min((cap * 85) // 100, 100 * 1024 * 1024))


# ----------------------------------------------------------------------------
# Kernels
# ----------------------------------------------------------------------------
def _residual_wr_kernel(x_ref, w_ref, b_ref, o_ref, *, tn, hp):
    """Weight-resident kernel: whole reduction per step.

    x_ref : (tm, Hp)  original dtype (f32/bf16) row slab of x
    w_ref : (Hp, tn)  bf16 weight column slab (constant across the inner axis)
    b_ref : (1,  tn)  f32 bias tile
    o_ref : (tm, tn)  output tile
    """
    xb = x_ref[...]
    acc = jnp.dot(xb.astype(jnp.bfloat16), w_ref[...],
                  preferred_element_type=jnp.float32)        # MXU, f32 acc
    if tn == hp:
        xres = xb                                            # whole width
    else:
        col = pl.multiple_of(pl.program_id(0) * tn, _LANE)   # 128-aligned
        xres = x_ref[:, pl.ds(col, tn)]                      # residual slice
    o_ref[...] = (acc
                  + b_ref[...].astype(jnp.float32)
                  + xres.astype(jnp.float32)).astype(o_ref.dtype)


def _residual_ksplit_kernel(x_ref, w_ref, b_ref, o_ref, acc_ref):
    """Fallback kernel with a split reduction axis (K last, "arbitrary").

    x_ref : (tm, tk)  x K-slice (also supplies the residual at k == j)
    w_ref : (tk, tn)  bf16 weight tile
    b_ref : (1,  tn)  f32 bias tile
    o_ref : (tm, tn)  output tile
    acc_ref: (tm, tn) f32 accumulator scratch (resident across K steps)
    Requires tk == tn (enforced by the planner) so the x tile at k == j
    covers exactly the output columns.
    """
    j = pl.program_id(1)
    k = pl.program_id(2)
    part = jnp.dot(x_ref[...].astype(jnp.bfloat16), w_ref[...],
                   preferred_element_type=jnp.float32)

    @pl.when(k == 0)
    def _():
        acc_ref[...] = part          # first-k write (no zero + add pass)

    @pl.when(k != 0)
    def _():
        acc_ref[...] += part

    @pl.when(k == j)
    def _():
        acc_ref[...] += x_ref[...].astype(jnp.float32)   # residual add

    @pl.when(k == pl.num_programs(2) - 1)
    def _():
        o_ref[...] = (acc_ref[...]
                      + b_ref[...].astype(jnp.float32)).astype(o_ref.dtype)


# ----------------------------------------------------------------------------
# Tile planning
# ----------------------------------------------------------------------------
def _plan_weight_resident(M, H, x_bytes, out_bytes, budget, tm_pref, tn_pref):
    """Returns (tm, tn, Mp, Hp) for the 2-D weight-resident grid, or None."""
    Hp = _round_up(H, _LANE)

    # rows: pad M to 8 first, then pick a tile that divides the padded extent
    if M <= tm_pref:
        tm = _round_up(M, _SUBLANE)
        Mp = tm
    else:
        Mp = _round_up(M, _SUBLANE)
        tm = _largest_divisor(Mp, tm_pref, _SUBLANE)
        if tm < max(256, tm_pref // 2):
            tm = tm_pref                      # accept <= tm-1 padded rows
            Mp = _round_up(M, tm)

    # keep the (double-buffered) x slab + its in-kernel bf16 copy bounded
    def x_slab_bytes(tm_):
        return 2 * tm_ * Hp * x_bytes + tm_ * Hp * 2

    while tm > _SUBLANE and x_slab_bytes(tm) > budget // 2:
        tm = max(_SUBLANE, _round_up(tm // 2, _SUBLANE))
        Mp = _round_up(M, tm)

    # columns: tiles must divide Hp (no 640 -> 1024 over-padding)
    def vmem_need(tn_):
        return (x_slab_bytes(tm)            # x slab (double buffered) + bf16 cast
                + 2 * Hp * tn_ * 2          # bf16 weight column slab
                + 2 * tn_ * 4               # bias
                + 2 * tm * tn_ * out_bytes  # output tile
                + tm * tn_ * 4)             # f32 accumulator value

    cands = [d for d in range(_LANE, Hp + 1, _LANE) if Hp % d == 0]
    cands.sort(reverse=True)
    tn = None
    for d in cands:
        if (d <= tn_pref or (d == Hp and Hp <= 2 * tn_pref)) and vmem_need(d) <= budget:
            tn = d
            break
    if tn is None:
        for d in cands:
            if vmem_need(d) <= budget:
                tn = d
                break
    if tn is None:
        return None                          # fall back to the K-split grid

    # v7x megacore: avoid a single-block grid when a cheap split exists
    if (Hp // tn) * (Mp // tm) < 2:
        if tn % (2 * _LANE) == 0:
            tn //= 2
        elif tm % (2 * _SUBLANE) == 0:
            tm //= 2

    return tm, tn, Mp, Hp


def _plan_k_split(M, H, tm_pref, tn_pref):
    Hp = _round_up(H, _LANE)
    tn = _largest_divisor(Hp, min(tn_pref, 512), _LANE)   # tn == tk
    tm = _round_up(M, _SUBLANE) if M <= tm_pref else tm_pref
    Mp = _round_up(M, tm)
    return tm, tn, Mp, Hp


# ----------------------------------------------------------------------------
# Parameter preparation (hoisted out of the per-call path)
# ----------------------------------------------------------------------------
def prepare_linear_params(weight, bias, *, input_major=False):
    """Pad to multiples of 128 and cast W to bf16 ONCE.

    weight: [H_out, H_in] (PyTorch nn.Linear layout) unless input_major=True
            (then it is already [H_in, H_out]).
    Returns (w_bf16 of shape (Hp, Hp), bias_f32 of shape (1, Hp)).
    """
    w = weight if input_major else weight.T
    h_in, h_out = w.shape
    if h_in != h_out:
        raise ValueError("Residual(Linear) requires a square weight (H -> H).")
    hp = _round_up(h_in, _LANE)
    w_p = jnp.pad(w, ((0, hp - h_in), (0, hp - h_out))).astype(jnp.bfloat16)
    b_p = jnp.pad(bias.astype(jnp.float32).reshape(1, h_out),
                  ((0, 0), (0, hp - h_out)))
    return w_p, b_p


# ----------------------------------------------------------------------------
# Fused forward pass
# ----------------------------------------------------------------------------
def residual_linear_prepared(x, w_p, b_p, *, tm_pref=512, tn_pref=1024,
                             vmem_limit_bytes=None, force_k_split=False):
    """y = x @ w + b + x with prepared (padded, bf16) weight `w_p`."""
    orig_shape = x.shape
    H = orig_shape[-1]
    Hp = w_p.shape[0]
    if w_p.shape != (Hp, Hp) or Hp != _round_up(H, _LANE):
        raise ValueError("weight was not prepared for this hidden size")

    x2d = x.reshape(-1, H)
    M = x2d.shape[0]
    xb = x.dtype.itemsize
    ob = x.dtype.itemsize

    vmem_limit = _default_vmem_limit(vmem_limit_bytes)
    budget = (vmem_limit * 9) // 10     # headroom for Mosaic internal scratch

    plan = None if force_k_split else _plan_weight_resident(
        M, H, xb, ob, budget, tm_pref, tn_pref)

    if plan is not None:
        tm, tn, Mp, _ = plan
        use_wr = True
    else:
        tm, tn, Mp, _ = _plan_k_split(M, H, tm_pref, tn_pref)
        use_wr = False

    # Single padded copy of x (rows -> multiple of 8/tm, lanes -> 128/Hp).
    if (Mp - M) or (Hp - H):
        x_p = jnp.pad(x2d, ((0, Mp - M), (0, Hp - H)))
    else:
        x_p = x2d

    if use_wr:
        nj, ni = Hp // tn, Mp // tm
        flops = 2 * Mp * Hp * Hp
        bytes_accessed = (nj * Mp * Hp * xb      # x slab re-read per column tile
                          + Hp * Hp * 2          # weight read once
                          + Hp * 4               # bias
                          + Mp * Hp * ob)        # output
        out_p = pl.pallas_call(
            functools.partial(_residual_wr_kernel, tn=tn, hp=Hp),
            out_shape=jax.ShapeDtypeStruct((Mp, Hp), x.dtype),
            grid_spec=pltpu.PrefetchScalarGridSpec(
                num_scalar_prefetch=0,
                grid=(nj, ni),                       # j outer, i inner (fast)
                in_specs=[
                    pl.BlockSpec((tm, Hp), lambda j, i: (i, 0)),  # x row slab
                    pl.BlockSpec((Hp, tn), lambda j, i: (0, j)),  # W col slab
                    pl.BlockSpec((1, tn),  lambda j, i: (0, j)),  # bias
                ],
                out_specs=pl.BlockSpec((tm, tn), lambda j, i: (i, j)),
            ),
            compiler_params=pltpu.CompilerParams(
                dimension_semantics=("parallel", "parallel"),
                vmem_limit_bytes=vmem_limit,
            ),
            cost_estimate=pl.CostEstimate(
                flops=flops, transcendentals=0, bytes_accessed=bytes_accessed),
        )(x_p, w_p, b_p)
    else:
        ni, nj, nk = Mp // tm, Hp // tn, Hp // tn
        flops = 2 * Mp * Hp * Hp
        bytes_accessed = (nj * Mp * Hp * xb
                          + ni * Hp * Hp * 2
                          + Hp * 4
                          + Mp * Hp * ob)
        out_p = pl.pallas_call(
            _residual_ksplit_kernel,
            out_shape=jax.ShapeDtypeStruct((Mp, Hp), x.dtype),
            grid_spec=pltpu.PrefetchScalarGridSpec(
                num_scalar_prefetch=0,
                grid=(ni, nj, nk),                   # K last ("arbitrary")
                in_specs=[
                    pl.BlockSpec((tm, tn), lambda i, j, k: (i, k)),  # x K-slice
                    pl.BlockSpec((tn, tn), lambda i, j, k: (k, j)),  # weight
                    pl.BlockSpec((1, tn),  lambda i, j, k: (0, j)),  # bias
                ],
                out_specs=pl.BlockSpec((tm, tn), lambda i, j, k: (i, j)),
                scratch_shapes=[pltpu.VMEM((tm, tn), jnp.float32)],
            ),
            compiler_params=pltpu.CompilerParams(
                dimension_semantics=("parallel", "parallel", "arbitrary"),
                vmem_limit_bytes=vmem_limit,
            ),
            cost_estimate=pl.CostEstimate(
                flops=flops, transcendentals=0, bytes_accessed=bytes_accessed),
        )(x_p, w_p, b_p)

    return out_p[:M, :H].reshape(orig_shape)


def residual_linear(x, weight, bias, *, input_major=False, **kwargs):
    """Functional form: prepares the weight per call (prefer ResidualLinear)."""
    w_p, b_p = prepare_linear_params(weight, bias, input_major=input_major)
    return residual_linear_prepared(x, w_p, b_p, **kwargs)


class ResidualLinear:
    """Pallas-fused equivalent of `Residual(nn.Linear(H, H))`.

    Weight pad + bf16 cast happen once at construction; __call__ only pads x
    (if needed) and launches the fused kernel.  Wrap the call in jax.jit in a
    real model so the pad/slice fuse with surrounding ops.
    """

    def __init__(self, weight, bias, *, input_major=False):
        self.w_p, self.b_p = prepare_linear_params(
            weight, bias, input_major=input_major)

    def __call__(self, x, **kwargs):
        return residual_linear_prepared(x, self.w_p, self.b_p, **kwargs)


# ----------------------------------------------------------------------------
# Self-test
# ----------------------------------------------------------------------------
if __name__ == "__main__":
    root = jax.random.PRNGKey(0)

    def run_check(B, S, H, **kwargs):
        kx, kw, kb = jax.random.split(jax.random.fold_in(root, H), 3)
        x = jax.random.normal(kx, (B, S, H), dtype=jnp.float32)
        # PyTorch nn.Linear layout: weight is [out, in], forward is x @ W^T + b.
        weight = jax.random.normal(kw, (H, H), dtype=jnp.float32) / jnp.sqrt(H)
        bias = jax.random.normal(kb, (H,), dtype=jnp.float32) * 0.01

        mod = ResidualLinear(weight, bias)          # prep hoisted out of call
        out = mod(x, **kwargs)
        jax.block_until_ready(out)

        ref = x @ weight.T + bias + x               # Residual(Linear) reference
        err = jnp.max(jnp.abs(out - ref))
        assert jnp.allclose(out, ref, atol=5e-2, rtol=5e-2), (
            f"mismatch vs reference (max abs err {err})")

    # Small shape consistent with the module: batch=2, seq=8, hidden=32.
    run_check(2, 8, 32)
    # Non-aligned shape: row padding (300 -> 304) + divisor-based column tile
    # (H=640 stays 640, not 1024) on the weight-resident path.
    run_check(3, 100, 640)
    # Force multiple column tiles so the in-kernel residual slice is exercised.
    run_check(3, 100, 640, tn_pref=128)
    # Exercise the K-split fallback kernel (normally only for very large H).
    run_check(2, 64, 640, force_k_split=True)
    print("KERNEL_OK")
</pallas_src>

<mosaic_0001>
module attributes {stable_mosaic.version = 11 : i64} {
  func.func @_residual_wr_kernel(%arg0: i32, %arg1: i32, %arg2: memref<8x128xf32, #tpu.memory_space<vmem>>, %arg3: memref<128x128xbf16, #tpu.memory_space<vmem>>, %arg4: memref<1x128xf32, #tpu.memory_space<vmem>>, %arg5: memref<8x128xf32, #tpu.memory_space<vmem>>) attributes {dimension_semantics = [#tpu.dimension_semantics<parallel>, #tpu.dimension_semantics<parallel>], iteration_bounds = array<i64: 1, 2>, scalar_prefetch = 0 : i64, scratch_operands = 0 : i64, tpu.core_type = #tpu.core_type<tc>, window_params = [{transform_indices = @transform_0, window_bounds = array<i64: 8, 128>}, {transform_indices = @transform_1, window_bounds = array<i64: 128, 128>}, {transform_indices = @transform_2, window_bounds = array<i64: 1, 128>}, {transform_indices = @transform_3, window_bounds = array<i64: 8, 128>}]} {
    %c0 = arith.constant 0 : index
    %c0_0 = arith.constant 0 : index
    %0 = vector.load %arg2[%c0, %c0_0] : memref<8x128xf32, #tpu.memory_space<vmem>>, vector<8x128xf32>
    %1 = arith.truncf %0 : vector<8x128xf32> to vector<8x128xbf16>
    %c0_1 = arith.constant 0 : index
    %c0_2 = arith.constant 0 : index
    %2 = vector.load %arg3[%c0_1, %c0_2] : memref<128x128xbf16, #tpu.memory_space<vmem>>, vector<128x128xbf16>
    %cst = arith.constant dense<0.000000e+00> : vector<8x128xf32>
    %3 = tpu.matmul %1, %2, %cst {dimension_numbers = #tpu.dot_dimension_numbers<[1], [0], [0], [1], [0, 0, 1, 1], [], []>} : vector<8x128xbf16>, vector<128x128xbf16>, vector<8x128xf32> -> vector<8x128xf32>
    %c0_3 = arith.constant 0 : index
    %c0_4 = arith.constant 0 : index
    %4 = vector.load %arg4[%c0_3, %c0_4] : memref<1x128xf32, #tpu.memory_space<vmem>>, vector<1x128xf32>
    %5 = vector.broadcast %4 : vector<1x128xf32> to vector<8x128xf32>
    %6 = arith.addf %3, %5 : vector<8x128xf32>
    %7 = arith.addf %6, %0 : vector<8x128xf32>
    %c0_5 = arith.constant 0 : index
    %c0_6 = arith.constant 0 : index
    %8 = vector.load %arg5[%c0_5, %c0_6] : memref<8x128xf32, #tpu.memory_space<vmem>>, vector<8x128xf32>
    tpu.vector_store %arg5[%c0_5, %c0_6], %7 {strides = array<i32>} : memref<8x128xf32, #tpu.memory_space<vmem>>, vector<8x128xf32>,
    return
  }
  func.func @transform_0(%arg0: i32, %arg1: i32) -> (i32, i32) {
    %c0_i32 = arith.constant 0 : i32
    %c0_i32_0 = arith.constant 0 : i32
    return %arg1, %c0_i32 : i32, i32
  }
  func.func @transform_1(%arg0: i32, %arg1: i32) -> (i32, i32) {
    %c0_i32 = arith.constant 0 : i32
    %c0_i32_0 = arith.constant 0 : i32
    return %c0_i32, %arg0 : i32, i32
  }
  func.func @transform_2(%arg0: i32, %arg1: i32) -> (i32, i32) {
    %c0_i32 = arith.constant 0 : i32
    %c0_i32_0 = arith.constant 0 : i32
    return %c0_i32, %arg0 : i32, i32
  }
  func.func @transform_3(%arg0: i32, %arg1: i32) -> (i32, i32) {
    %c0_i32 = arith.constant 0 : i32
    return %arg1, %arg0 : i32, i32
  }
}

</mosaic_0001>

<llo_original>
// kernel: tpu_custom_call.1
$region0: #{tpu_custom_call.1}
  #allocation0 [shape = 'u32[]', space=smem, size = 0x4, offset = 0x4, fixed_abs, tag = 'smem constant byte address 0x4 - core index']
  #allocation1 [shape = 'u32[144,128]{1,0:T(1,128)}', space=vmem, size = 0x12000, scoped, tag = 'internal scratch']
  %s0 = inlined_call_operand.hbm [shape: f32[16,128], index: 0, kind: input, shape index: {}]
  %s1 = inlined_call_operand.hbm [shape: bf16[128,128], index: 1, kind: input, shape index: {}]
  %s2 = inlined_call_operand.vmem [shape: f32[1,128], index: 2, kind: input, shape index: {}]
  %s3 = inlined_call_operand.hbm [shape: f32[16,128], index: 3, kind: output, shape index: {}]
  %s4 = sld [smem:[#allocation0]]
  $region53: #{tpu_custom_call.1} parent=0
    _
  %s6 = ssub.s32 1, %s4
  %s7 = scalar_select 0, %s6, %s4
  $region1: #{tpu_custom_call.1} parent=0
    #allocation2 [shape = 'u8[8192]{0}', space=vmem, size = 0x2000, scoped, tag = 'input window, operand 0']
    #allocation3 [shape = 's32[2]{0}', space=sflag, size = 0x8, scoped, tag = 'scoped memory for tpu_custom_call.1']
    #allocation4 [shape = 's32[2]{0}', space=sflag, size = 0x8, scoped, tag = 'scoped memory for tpu_custom_call.1']
    #allocation5 [shape = 'u8[32768]{0}', space=vmem, size = 0x8000, scoped, tag = 'input window, operand 1, single buffered']
    #allocation6 [shape = 's32[1]{0}', space=sflag, size = 0x4, scoped, tag = 'scoped memory for tpu_custom_call.1']
    #allocation7 [shape = 'u8[8192]{0}', space=vmem, size = 0x2000, scoped, tag = 'output window, operand 0']
    %8 = vsyncpa [#allocation3], 0
    %s9 = scalar_lea.sflag [#allocation3], 1
    %10 = vsyncpa %s9, 0
    %11 = vsyncpa [#allocation6], 0
    %12 = vsyncpa [#allocation4], 0
    %s13 = scalar_lea.sflag [#allocation4], 1
    %14 = vsyncpa %s13, 0
    loop: start=0, step=1, limit=4
    $region2: #{tpu_custom_call.1} parent=1 // loop_pre_header
      _
    $region3: #{tpu_custom_call.1} parent=1 // loop_header
      %s16 = sphi 0, %s20
      %p17 = scmp.ge.s32.totalorder %s16, 4
      %s23 = sphi 0, %s35
      %s24 = sphi 0, %s31
      %s25 = sphi 0, %s23
      %s26 = sphi 0, %s24
      %s27 = sphi 0, %s25
      %s28 = sphi 0, %s26
      %s38 = sphi 0, %s40
      %s41 = sphi 0, %s38
      %s42 = sphi 0, %s41
      %s58 = sphi 0, %s42
      %s64 = sphi 0, %s66
      %s67 = sphi 0, %s64
      %s68 = sphi 0, %s67
      %s84 = sphi 0, %s68
      %s90 = sphi 0, %s92
      %s93 = sphi 0, %s90
      %s94 = sphi 0, %s93
      %s110 = sphi 0, %s94
      %s118 = sphi 0, %s120
      %s121 = sphi 0, %s118
      %s122 = sphi 0, %s121
      %s138 = sphi 0, %s122
    $region4: #{tpu_custom_call.1} parent=1 // loop_header_branch
      %19 = sbr.rel (%p17) target = $region8
    $region5: #{tpu_custom_call.1} parent=1 // loop_body
      %s21 = ssub.s32 %s16, 1
      %s22 = ssub.s32 %s16, 2
      %s29 = sadd.s32 1, %s24
      %p30 = scmp.ge.s32.totalorder %s29, 2
      %s31 = scalar_select %p30, 0, %s29
      %s32 = sadd.s32 1, %s23
      %s33 = scalar_select %p30, %s32, %s23
      %p34 = scmp.ge.s32.totalorder %s33, 1
      %s35 = scalar_select %p34, 0, %s33
      %s36 = ssub.s32 %s24, %s31
      %p37 = scmp.eq.s32.totalorder %s36, 0
      %s39 = sadd.s32 %s38, 1
      %s40 = scalar_select %p37, %s38, %s39
      %p43 = pneg %p37
      %p44 = scmp.eq.s32.totalorder %s16, 1
      %p45 = por %p43, %p44
      %p46 = scmp.ne.s32.totalorder %s38, %s41
      %p47 = scmp.eq.s32.totalorder %s16, 0
      %p48 = por %p46, %p47
      %p49 = scmp.ne.s32.totalorder %s38, %s41
      %p50 = scmp.eq.s32.totalorder %s21, 1
      %p51 = por %p49, %p50
      %p52 = scmp.ne.s32.totalorder %s41, %s42
      %p53 = scmp.eq.s32.totalorder %s21, 0
      %p54 = por %p52, %p53
      %p55 = scmp.ne.s32.totalorder %s41, %s42
      %p56 = scmp.eq.s32.totalorder %s22, 1
      %p57 = por %p55, %p56
      %p59 = scmp.ne.s32.totalorder %s42, %s58
      %p60 = scmp.eq.s32.totalorder %s22, 0
      %p61 = por %p59, %p60
      %s62 = ssub.s32 %s23, %s35
      %p63 = scmp.eq.s32.totalorder %s62, 0
      %s65 = sadd.s32 %s64, 1
      %s66 = scalar_select %p63, %s64, %s65
      %p69 = pneg %p63
      %p70 = scmp.eq.s32.totalorder %s16, 1
      %p71 = por %p69, %p70
      %p72 = scmp.ne.s32.totalorder %s64, %s67
      %p73 = scmp.eq.s32.totalorder %s16, 0
      %p74 = por %p72, %p73
      %p75 = scmp.ne.s32.totalorder %s64, %s67
      %p76 = scmp.eq.s32.totalorder %s21, 1
      %p77 = por %p75, %p76
      %p78 = scmp.ne.s32.totalorder %s67, %s68
      %p79 = scmp.eq.s32.totalorder %s21, 0
      %p80 = por %p78, %p79
      %p81 = scmp.ne.s32.totalorder %s67, %s68
      %p82 = scmp.eq.s32.totalorder %s22, 1
      %p83 = por %p81, %p82
      %p85 = scmp.ne.s32.totalorder %s68, %s84
      %p86 = scmp.eq.s32.totalorder %s22, 0
      %p87 = por %p85, %p86
      %s88 = ssub.s32 %s23, %s35
      %p89 = scmp.eq.s32.totalorder %s88, 0
      %s91 = sadd.s32 %s90, 1
      %s92 = scalar_select %p89, %s90, %s91
      %p95 = pneg %p89
      %p96 = scmp.eq.s32.totalorder %s16, 1
      %p97 = por %p95, %p96
      %p98 = scmp.ne.s32.totalorder %s90, %s93
      %p99 = scmp.eq.s32.totalorder %s16, 0
      %p100 = por %p98, %p99
      %p101 = scmp.ne.s32.totalorder %s90, %s93
      %p102 = scmp.eq.s32.totalorder %s21, 1
      %p103 = por %p101, %p102
      %p104 = scmp.ne.s32.totalorder %s93, %s94
      %p105 = scmp.eq.s32.totalorder %s21, 0
      %p106 = por %p104, %p105
      %p107 = scmp.ne.s32.totalorder %s93, %s94
      %p108 = scmp.eq.s32.totalorder %s22, 1
      %p109 = por %p107, %p108
      %p111 = scmp.ne.s32.totalorder %s94, %s110
      %p112 = scmp.eq.s32.totalorder %s22, 0
      %p113 = por %p111, %p112
      %s114 = ssub.s32 %s24, %s31
      %s115 = ssub.s32 %s23, %s35
      %s116 = sor.u32 %s114, %s115
      %p117 = scmp.eq.s32.totalorder %s116, 0
      %s119 = sadd.s32 %s118, 1
      %s120 = scalar_select %p117, %s118, %s119
      %p123 = pneg %p117
      %p124 = scmp.eq.s32.totalorder %s16, 1
      %p125 = por %p123, %p124
      %p126 = scmp.ne.s32.totalorder %s118, %s121
      %p127 = scmp.eq.s32.totalorder %s16, 0
      %p128 = por %p126, %p127
      %p129 = scmp.ne.s32.totalorder %s118, %s121
      %p130 = scmp.eq.s32.totalorder %s21, 1
      %p131 = por %p129, %p130
      %p132 = scmp.ne.s32.totalorder %s121, %s122
      %p133 = scmp.eq.s32.totalorder %s21, 0
      %p134 = por %p132, %p133
      %p135 = scmp.ne.s32.totalorder %s121, %s122
      %p136 = scmp.eq.s32.totalorder %s22, 1
      %p137 = por %p135, %p136
      %p139 = scmp.ne.s32.totalorder %s122, %s138
      %p140 = scmp.eq.s32.totalorder %s22, 0
      %p141 = por %p139, %p140
      %p142 = scmp.le.s32.totalorder 1, %s16
      %p143 = scmp.lt.s32.totalorder %s16, 3
      %p144 = pnand %p142, %p143
      %p145 = pneg %p144
      // Predicated region
      $region9: #{tpu_custom_call.1} parent=5 // pred_check
        _
      $region10: #{tpu_custom_call.1} parent=5 // pred_check_branch
        %147 = sbr.rel (%p144) target = $region12
      $region11: #{tpu_custom_call.1} parent=5 // pred_region
        %s148 = ssub.s32 %s16, 1
        // Predicated region
        $region13: #{tpu_custom_call.1} parent=11 // pred_check
          %p149 = pneg %p80
        $region14: #{tpu_custom_call.1} parent=11 // pred_check_branch
          %151 = sbr.rel (%p149) target = $region16
        $region15: #{tpu_custom_call.1} parent=11 // pred_region
          %s153 = ssub.s32 1024, 1024
          %154 = vsyncadd [#allocation6], %s153
          %s155 = smul.addr %s25, 64
          %s156 = scalar_lea.hbm %s1, %s155
          %s157 = sshll.u32 [#allocation5], 4
          %s158 = int_to_ptr.vmem [resolvable:$true] %s157
          %163 = dma.hbm_to_vmem [thread:$0]  %s156, 1024, %s158, [#allocation6], 64, 64, 4
        $region16: #{tpu_custom_call.1} parent=11 // pred_fallthru
          _
        // Predicated region
        $region17: #{tpu_custom_call.1} parent=11 // pred_check
          %p164 = pneg %p106
        $region18: #{tpu_custom_call.1} parent=11 // pred_check_branch
          %166 = sbr.rel (%p164) target = $region20
        $region19: #{tpu_custom_call.1} parent=11 // pred_region
          %p167 = scmp.lt.s32.totalorder %s25, 0
          %s168 = scalar_select %p167, %s25, 0
          %s169 = scalar_lea.vmem %s2, %s168
        $region20: #{tpu_custom_call.1} parent=11 // pred_fallthru
          _
      $region12: #{tpu_custom_call.1} parent=5 // pred_fallthru
        _
      %p170 = scmp.lt.s32.totalorder %s16, 2
      // Predicated region
      $region21: #{tpu_custom_call.1} parent=5 // pred_check
        %p171 = pneg %p170
      $region22: #{tpu_custom_call.1} parent=5 // pred_check_branch
        %173 = sbr.rel (%p171) target = $region24
      $region23: #{tpu_custom_call.1} parent=5 // pred_region
        // Predicated region
        $region25: #{tpu_custom_call.1} parent=23 // pred_check
          %p174 = pneg %p48
        $region26: #{tpu_custom_call.1} parent=23 // pred_check_branch
          %176 = sbr.rel (%p174) target = $region28
        $region27: #{tpu_custom_call.1} parent=23 // pred_region
          %s177 = sand.u32 %s38, 1
          %s178 = scalar_lea.sflag [#allocation3], %s177
          %s179 = sand.u32 %s38, 1
          %s180 = smul.addr %s179, 8
          %s181 = scalar_lea.vmem [#allocation2], %s180
          %s183 = ssub.s32 128, 128
          %184 = vsyncadd %s178, %s183
          %s185 = smul.addr %s24, 128
          %s186 = scalar_lea.hbm %s0, %s185
          %s188 = sshll.u32 %s181, 4
          %s189 = int_to_ptr.vmem [resolvable:$true] %s188
          %191 = dma.hbm_to_vmem [thread:$0]  %s186, 128, %s189, %s178
        $region28: #{tpu_custom_call.1} parent=23 // pred_fallthru
          _
      $region24: #{tpu_custom_call.1} parent=5 // pred_fallthru
        _
      %p192 = scmp.le.s32.totalorder 1, %s16
      %p193 = scmp.lt.s32.totalorder %s16, 3
      %p194 = pnand %p192, %p193
      %p195 = pneg %p194
      // Predicated region
      $region29: #{tpu_custom_call.1} parent=5 // pred_check
        _
      $region30: #{tpu_custom_call.1} parent=5 // pred_check_branch
        %197 = sbr.rel (%p194) target = $region32
      $region31: #{tpu_custom_call.1} parent=5 // pred_region
        %s198 = ssub.s32 %s16, 1
        %s199 = sand.u32 %s41, 1
        %s200 = scalar_lea.sflag [#allocation3], %s199
        %s201 = sand.u32 %s41, 1
        %s202 = smul.addr %s201, 8
        %s203 = scalar_lea.vmem [#allocation2], %s202
        // Predicated region
        $region33: #{tpu_custom_call.1} parent=31 // pred_check
          %p204 = pneg %p54
        $region34: #{tpu_custom_call.1} parent=31 // pred_check_branch
          %206 = sbr.rel (%p204) target = $region36
        $region35: #{tpu_custom_call.1} parent=31 // pred_region
          %207 = dma.done %s200, 128
        $region36: #{tpu_custom_call.1} parent=31 // pred_fallthru
          _
        // Predicated region
        $region37: #{tpu_custom_call.1} parent=31 // pred_check
          %p208 = pneg %p80
        $region38: #{tpu_custom_call.1} parent=31 // pred_check_branch
          %210 = sbr.rel (%p208) target = $region40
        $region39: #{tpu_custom_call.1} parent=31 // pred_region
          %211 = dma.done [#allocation6], 1024
        $region40: #{tpu_custom_call.1} parent=31 // pred_fallthru
          _
        %s212 = sand.u32 %s41, 1
        %s213 = scalar_lea.sflag [#allocation3], %s212
        %s214 = sand.u32 %s41, 1
        %s215 = smul.addr %s214, 8
        %s216 = scalar_lea.vmem [#allocation2], %s215
        %p217 = pneg %p54
        %p218 = pneg %p51
        %p219 = pneg %p80
        %p220 = pneg %p77
        %p221 = scmp.lt.s32.totalorder %s25, 0
        %s222 = scalar_select %p221, %s25, 0
        %s223 = scalar_lea.vmem %s2, %s222
        %p224 = pneg %p106
        %p225 = pneg %p103
        %p226 = pneg %p134
        %p227 = pneg %p131
        %s228 = sand.u32 %s121, 1
        %s229 = scalar_lea.sflag [#allocation4], %s228
        %s230 = sand.u32 %s121, 1
        %s231 = smul.addr %s230, 8
        %s232 = scalar_lea.vmem [#allocation7], %s231
        %p233 = scmp.lt.s32.totalorder %s25, 0
        %s234 = scalar_select %p233, %s25, 0
        %s235 = scalar_lea.vmem %s2, %s234
        %v237 = vld [vmem:[%s203] sm:$0xff]
        %v238 = vpack.c.bf16 %v237, %v237
        %v239 = vld [vmem:[#allocation5] sm:$0xf]
        %v240 = vld [vmem:[#allocation5 + $0x4] sm:$0xf]
        %v241 = vld [vmem:[#allocation5 + $0x8] sm:$0xf]
        %v242 = vld [vmem:[#allocation5 + $0xc] sm:$0xf]
        %v243 = vld [vmem:[#allocation5 + $0x10] sm:$0xf]
        %v244 = vld [vmem:[#allocation5 + $0x14] sm:$0xf]
        %v245 = vld [vmem:[#allocation5 + $0x18] sm:$0xf]
        %v246 = vld [vmem:[#allocation5 + $0x1c] sm:$0xf]
        %v247 = vld [vmem:[#allocation5 + $0x20] sm:$0xf]
        %v248 = vld [vmem:[#allocation5 + $0x24] sm:$0xf]
        %v249 = vld [vmem:[#allocation5 + $0x28] sm:$0xf]
        %v250 = vld [vmem:[#allocation5 + $0x2c] sm:$0xf]
        %v251 = vld [vmem:[#allocation5 + $0x30] sm:$0xf]
        %v252 = vld [vmem:[#allocation5 + $0x34] sm:$0xf]
        %v253 = vld [vmem:[#allocation5 + $0x38] sm:$0xf]
        %v254 = vld [vmem:[#allocation5 + $0x3c] sm:$0xf]
        %v255 = vld [vmem:[%s235] sm:$0x1]
        %v257 = vlaneseq
        %v258 = vshrl.u32 %v257, 7
        %v259 = vsub.s32 0, %v258
        %v260 = vrot.slane %v255, %v259
        %v278 = vunpack.c.l.b16 %v239
        %v279 = vunpack.c.l.b16 %v240
        %v280 = vunpack.c.l.b16 %v241
        %v281 = vunpack.c.l.b16 %v242
        %v282 = vunpack.c.l.b16 %v243
        %v283 = vunpack.c.l.b16 %v244
        %v284 = vunpack.c.l.b16 %v245
        %v285 = vunpack.c.l.b16 %v246
        %v286 = vunpack.c.l.b16 %v247
        %v287 = vunpack.c.l.b16 %v248
        %v288 = vunpack.c.l.b16 %v249
        %v289 = vunpack.c.l.b16 %v250
        %v290 = vunpack.c.l.b16 %v251
        %v291 = vunpack.c.l.b16 %v252
        %v292 = vunpack.c.l.b16 %v253
        %v293 = vunpack.c.l.b16 %v254
        %v294 = vpack.c.b16 %v279, %v278
        %v295 = vpack.c.b16 %v281, %v280
        %v296 = vpack.c.b16 %v283, %v282
        %v297 = vpack.c.b16 %v285, %v284
        %v298 = vpack.c.b16 %v287, %v286
        %v299 = vpack.c.b16 %v289, %v288
        %v300 = vpack.c.b16 %v291, %v290
        %v301 = vpack.c.b16 %v293, %v292
        %310 = vmatprep.subr.bf16.mxu0 0
        %311 = vmatpush1.bf16.msra.mxu0 %v301
        %312 = vmatprep.subr.bf16.mxu0 0
        %313 = vmatpush1.bf16.msra.mxu0 %v300
        %314 = vmatprep.subr.bf16.mxu0 0
        %315 = vmatpush1.bf16.msra.mxu0 %v299
        %316 = vmatprep.subr.bf16.mxu0 0
        %317 = vmatpush1.bf16.msra.mxu0 %v298
        %318 = vmatprep.subr.bf16.mxu0 0
        %319 = vmatpush1.bf16.msra.mxu0 %v297
        %320 = vmatprep.subr.bf16.mxu0 0
        %321 = vmatpush1.bf16.msra.mxu0 %v296
        %322 = vmatprep.subr.bf16.mxu0 0
        %323 = vmatpush1.bf16.msra.mxu0 %v295
        %324 = vmatprep.subr.bf16.mxu0 0
        %325 = vmatpush1.bf16.msra.mxu0 %v294
        %326 = vmatprep.subr.bf16.mxu0 0
        %327 = vmatpush2.bf16.msra.mxu0 0
        %328 = vmatprep.subr.bf16.mxu0 0
        %329 = vmatpush2.bf16.msra.mxu0 0
        %330 = vmatprep.subr.bf16.mxu0 0
        %331 = vmatpush2.bf16.msra.mxu0 0
        %332 = vmatprep.subr.bf16.mxu0 0
        %333 = vmatpush2.bf16.msra.mxu0 0
        %334 = vmatprep.subr.bf16.mxu0 0
        %335 = vmatpush2.bf16.msra.mxu0 0
        %336 = vmatprep.subr.bf16.mxu0 0
        %337 = vmatpush2.bf16.msra.mxu0 0
        %338 = vmatprep.subr.bf16.mxu0 0
        %339 = vmatpush2.bf16.msra.mxu0 0
        %340 = vmatprep.subr.bf16.mxu0 0
        %341 = vmatpush2.bf16.msra.mxu0 0
        %342 = vmatprep.mubr.bf16.mxu0 0
        %343 = vmatmul.mubr.bf16.gmra.mxu0 %v238
        %v344 = vpop.f32.mrf.mxu0
        %v345 = vadd.f32 %v260, %v344
        %v346 = vpop.f32.mrf.mxu0
        %v347 = vpop.f32.mrf.mxu0
        %v348 = vpop.f32.mrf.mxu0
        %349 = vdwg.mxu0
        %v350 = vadd.f32 %v345, %v237
        %351 = vst [vmem:[%s232] sm:$0xff] %v350
        %s352 = sand.u32 %s121, 1
        %s353 = scalar_lea.sflag [#allocation4], %s352
        %s354 = sand.u32 %s121, 1
        %s355 = smul.addr %s354, 8
        %s356 = scalar_lea.vmem [#allocation7], %s355
        // Predicated region
        $region41: #{tpu_custom_call.1} parent=31 // pred_check
          %p357 = pneg %p131
        $region42: #{tpu_custom_call.1} parent=31 // pred_check_branch
          %359 = sbr.rel (%p357) target = $region44
        $region43: #{tpu_custom_call.1} parent=31 // pred_region
          %s361 = ssub.s32 128, 128
          %362 = vsyncadd %s353, %s361
          %s363 = sadd.s32 %s25, %s26
          %s364 = smul.addr %s363, 128
          %s365 = scalar_lea.hbm %s3, %s364
          %s367 = sshll.u32 %s356, 4
          %s368 = int_to_ptr.vmem [resolvable:$true] %s367
          %370 = dma.vmem_to_hbm [thread:$0]  %s368, 128, %s365, %s353
        $region44: #{tpu_custom_call.1} parent=31 // pred_fallthru
          _
      $region32: #{tpu_custom_call.1} parent=5 // pred_fallthru
        _
      %p371 = scmp.le.s32.totalorder 2, %s16
      // Predicated region
      $region45: #{tpu_custom_call.1} parent=5 // pred_check
        %p372 = pneg %p371
      $region46: #{tpu_custom_call.1} parent=5 // pred_check_branch
        %374 = sbr.rel (%p372) target = $region48
      $region47: #{tpu_custom_call.1} parent=5 // pred_region
        %s375 = ssub.s32 %s16, 2
        // Predicated region
        $region49: #{tpu_custom_call.1} parent=47 // pred_check
          %p376 = pneg %p137
        $region50: #{tpu_custom_call.1} parent=47 // pred_check_branch
          %378 = sbr.rel (%p376) target = $region52
        $region51: #{tpu_custom_call.1} parent=47 // pred_region
          %s379 = sand.u32 %s122, 1
          %s380 = scalar_lea.sflag [#allocation4], %s379
          %s381 = sand.u32 %s122, 1
          %s382 = smul.addr %s381, 8
          %s383 = scalar_lea.vmem [#allocation7], %s382
          %384 = dma.done %s380, 128
        $region52: #{tpu_custom_call.1} parent=47 // pred_fallthru
          _
      $region48: #{tpu_custom_call.1} parent=5 // pred_fallthru
        _
    $region6: #{tpu_custom_call.1} parent=1 // loop_footer
      %s20 = sadd.s32 1, %s16
    $region7: #{tpu_custom_call.1} parent=1 // loop_footer_branch
      %15 = sbr.rel target = $region3
    $region8: #{tpu_custom_call.1} parent=1 // loop_exit
      _
    %385 = vsyncpa [#allocation3], 1
    %s386 = scalar_lea.sflag [#allocation3], 1
    %387 = vsyncpa %s386, 1
    %388 = vsyncpa [#allocation6], 1
    %389 = vsyncpa [#allocation4], 1
    %s390 = scalar_lea.sflag [#allocation4], 1
    %391 = vsyncpa %s390, 1

</llo_original>
